<compile_context>
chip_gen: v6e
topology: v6e:2x2x1
jax: 0.10.0
libtpu: 0.0.40
codegen_flags: <defaults>
</compile_context>

<pallas_src>
import functools

import jax
import jax.numpy as jnp
from jax.experimental import pallas as pl
from jax.experimental.pallas import tpu as pltpu

LANE = 128          # vreg lane width (last dim)
SUBLANE_BF16 = 16   # bf16 sublane pack grain (second-to-last dim)


def _round_up(v, m):
    return ((v + m - 1) // m) * m


def _pad2d(a, rows, cols):
    r, c = a.shape
    if r == rows and c == cols:
        return a
    return jnp.pad(a, ((0, rows - r), (0, cols - c)))


def _largest_divisor_tile(n, max_tile):
    """Largest multiple of SUBLANE_BF16 that divides n and is <= max_tile."""
    t = min(max_tile, n)
    t -= t % SUBLANE_BF16
    t = max(t, SUBLANE_BF16)
    while t > SUBLANE_BF16 and n % t:
        t -= SUBLANE_BF16
    return t


def _pick_row_tile(n_pad, row_tile):
    """Row tile that divides n_pad; prefer >= 2 grid steps (v7x megacore)."""
    tm = _largest_divisor_tile(n_pad, row_tile)
    if n_pad // tm < 2 and n_pad >= 2 * SUBLANE_BF16:
        tm = _largest_divisor_tile(n_pad, n_pad // 2)
    return tm


def _vmem_limit_bytes():
    # ~75% of per-core VMEM leaves headroom for compiler scratch / double
    # buffers: ~48 MiB on v7x (64 MiB/TC), ~96 MiB on v5e/v6e (128 MiB/TC).
    try:
        cap = pltpu.get_tpu_info().vmem_capacity_bytes
        return max(32 << 20, min(int(cap) * 3 // 4, 100 << 20))
    except Exception:
        return None  # fall back to the compiler's default scoped limit


def _compiler_params(dimension_semantics):
    kwargs = dict(dimension_semantics=dimension_semantics)
    limit = _vmem_limit_bytes()
    if limit is not None:
        kwargs["vmem_limit_bytes"] = limit
    return pltpu.CompilerParams(**kwargs)


# ----------------------------------------------------------------------------
# Projection kernel: XW = x @ W  (row-tiled, bf16 x bf16 -> f32 acc -> bf16)
# ----------------------------------------------------------------------------
def _project_kernel(x_ref, w_ref, o_ref):
    o_ref[...] = jnp.dot(
        x_ref[...], w_ref[...], preferred_element_type=jnp.float32
    ).astype(o_ref.dtype)


def _project(x_bf16, w_bf16, *, row_tile):
    n_pad, f_pad = x_bf16.shape
    o_pad = w_bf16.shape[1]
    tm = _pick_row_tile(n_pad, row_tile)
    return pl.pallas_call(
        _project_kernel,
        out_shape=jax.ShapeDtypeStruct((n_pad, o_pad), jnp.bfloat16),
        grid=(n_pad // tm,),
        in_specs=[
            pl.BlockSpec((tm, f_pad), lambda i: (i, 0)),      # x row tile
            pl.BlockSpec((f_pad, o_pad), lambda i: (0, 0)),   # W resident
        ],
        out_specs=pl.BlockSpec((tm, o_pad), lambda i: (i, 0)),
        compiler_params=_compiler_params(("parallel",)),
    )(x_bf16, w_bf16)


# ----------------------------------------------------------------------------
# Aggregation kernel: out = act(adj @ XW + b), K-tiled over adjacency columns
# ----------------------------------------------------------------------------
def _aggregate_kernel(adj_ref, xw_ref, b_ref, o_ref, acc_ref, *, apply_relu):
    k = pl.program_id(1)

    @pl.when(k == 0)
    def _():
        acc_ref[...] = jnp.zeros_like(acc_ref)

    acc_ref[...] += jnp.dot(
        adj_ref[...], xw_ref[...], preferred_element_type=jnp.float32
    )

    @pl.when(k == pl.num_programs(1) - 1)
    def _():
        out = acc_ref[...] + b_ref[...]          # bias / relu epilogue in f32
        if apply_relu:
            out = jnp.maximum(out, 0.0)
        o_ref[...] = out.astype(o_ref.dtype)


def _aggregate(adj_bf16, xw_bf16, b, *, apply_relu, out_dtype, row_tile, col_tile):
    n_pad = adj_bf16.shape[0]
    o_pad = xw_bf16.shape[1]
    tm = _pick_row_tile(n_pad, row_tile)
    # Column tile: either the full (padded) node axis, or a 128-aligned tile
    # that divides n_pad (the wrapper pads n_pad to a multiple of col_tile).
    tk = col_tile if n_pad > col_tile else n_pad
    kernel = functools.partial(_aggregate_kernel, apply_relu=apply_relu)
    return pl.pallas_call(
        kernel,
        out_shape=jax.ShapeDtypeStruct((n_pad, o_pad), out_dtype),
        grid=(n_pad // tm, n_pad // tk),
        in_specs=[
            pl.BlockSpec((tm, tk), lambda i, k: (i, k)),       # adj tile
            pl.BlockSpec((tk, o_pad), lambda i, k: (k, 0)),    # projected feats
            pl.BlockSpec((1, o_pad), lambda i, k: (0, 0)),     # bias
        ],
        out_specs=pl.BlockSpec((tm, o_pad), lambda i, k: (i, 0)),
        scratch_shapes=[pltpu.VMEM((tm, o_pad), jnp.float32)],
        compiler_params=_compiler_params(("parallel", "arbitrary")),
    )(adj_bf16, xw_bf16, b)


# ----------------------------------------------------------------------------
# Full forward pass
# ----------------------------------------------------------------------------
@functools.partial(jax.jit, static_argnames=("row_tile", "col_tile"))
def my_solute_gcn_forward(x, adj, w1, b1, w2, b2, *, row_tile=512, col_tile=512):
    n, nfeat = x.shape
    nhid = w1.shape[1]
    nclass = w2.shape[1]

    # Pad the node axis to the bf16 sublane grain (16) -- and, when K-tiling
    # kicks in, to a multiple of the 128-aligned column tile -- and every
    # feature axis to a full 128-lane group.  Zero padding is exact: padded
    # adj rows/cols are zero, so padded rows/cols never leak into the real
    # outputs, which are sliced out at the end.
    n_pad = _round_up(n, SUBLANE_BF16)
    if n_pad > col_tile:
        n_pad = _round_up(n_pad, col_tile)
    f_pad = _round_up(nfeat, LANE)
    h_pad = _round_up(nhid, LANE)
    c_pad = _round_up(nclass, LANE)

    # All MXU operands cast to bf16 once here (no in-kernel per-iteration casts).
    adj_p = _pad2d(adj, n_pad, n_pad).astype(jnp.bfloat16)
    x_p = _pad2d(x, n_pad, f_pad).astype(jnp.bfloat16)
    w1_p = _pad2d(w1, f_pad, h_pad).astype(jnp.bfloat16)
    w2_p = _pad2d(w2, h_pad, c_pad).astype(jnp.bfloat16)
    b1_p = _pad2d(b1, 1, h_pad)     # bias / epilogue stays f32
    b2_p = _pad2d(b2, 1, c_pad)

    # Layer 1: h = relu(adj @ (x @ W1) + b1)
    xw1 = _project(x_p, w1_p, row_tile=row_tile)
    h = _aggregate(adj_p, xw1, b1_p, apply_relu=True, out_dtype=jnp.bfloat16,
                   row_tile=row_tile, col_tile=col_tile)
    # dropout: identity (eval mode)
    # Layer 2: out = adj @ (h @ W2) + b2
    xw2 = _project(h, w2_p, row_tile=row_tile)
    out = _aggregate(adj_p, xw2, b2_p, apply_relu=False, out_dtype=jnp.float32,
                     row_tile=row_tile, col_tile=col_tile)

    return out[:n, :nclass]


def init_gcn_params(key, nfeat, nhid, nclass):
    """Matches GraphConvolution.reset_parameters:
       uniform(-stdv, stdv) with stdv = 1/sqrt(out_features)."""
    k1, k2, k3, k4 = jax.random.split(key, 4)
    stdv1 = 1.0 / jnp.sqrt(jnp.float32(nhid))
    stdv2 = 1.0 / jnp.sqrt(jnp.float32(nclass))
    w1 = jax.random.uniform(k1, (nfeat, nhid), jnp.float32, -stdv1, stdv1)
    b1 = jax.random.uniform(k2, (1, nhid), jnp.float32, -stdv1, stdv1)
    w2 = jax.random.uniform(k3, (nhid, nclass), jnp.float32, -stdv2, stdv2)
    b2 = jax.random.uniform(k4, (1, nclass), jnp.float32, -stdv2, stdv2)
    return w1, b1, w2, b2


def reference_forward(x, adj, w1, b1, w2, b2):
    h = jnp.maximum(adj @ (x @ w1) + b1, 0.0)
    return adj @ (h @ w2) + b2


if __name__ == "__main__":
    # Small shapes consistent with the module: N nodes, nfeat -> nhid -> nclass.
    N, NFEAT, NHID, NCLASS = 32, 16, 32, 8
    DROPOUT = 0.5  # unused at eval time

    key = jax.random.PRNGKey(0)
    kx, kadj, kp = jax.random.split(key, 3)

    x = jax.random.normal(kx, (N, NFEAT), jnp.float32)

    # Symmetric, row-normalized adjacency (adj_hat = D^-1 (A + I)).
    a = (jax.random.uniform(kadj, (N, N)) > 0.7).astype(jnp.float32)
    a = jnp.maximum(a, a.T) + jnp.eye(N, dtype=jnp.float32)
    adj = a / jnp.sum(a, axis=1, keepdims=True)

    w1, b1, w2, b2 = init_gcn_params(kp, NFEAT, NHID, NCLASS)

    out = my_solute_gcn_forward(x, adj, w1, b1, w2, b2)
    out = jax.block_until_ready(out)

    ref = reference_forward(x, adj, w1, b1, w2, b2)
    assert out.shape == (N, NCLASS), out.shape
    # Fully-bf16 MXU datapath (adj, x, W, XW, h) with f32 accumulation.
    max_err = float(jnp.max(jnp.abs(out - ref)))
    assert jnp.allclose(out, ref, atol=5e-2, rtol=5e-2), f"max_err={max_err}"

    print("KERNEL_OK")
</pallas_src>

<mosaic_0001>
module attributes {stable_mosaic.version = 11 : i64} {
  func.func @_aggregate_kernel(%arg0: i32, %arg1: i32, %arg2: memref<16x32xbf16, #tpu.memory_space<vmem>>, %arg3: memref<32x128xbf16, #tpu.memory_space<vmem>>, %arg4: memref<1x128xf32, #tpu.memory_space<vmem>>, %arg5: memref<16x128xbf16, #tpu.memory_space<vmem>>, %arg6: memref<16x128xf32, #tpu.memory_space<vmem>>) attributes {dimension_semantics = [#tpu.dimension_semantics<parallel>, #tpu.dimension_semantics<arbitrary>], iteration_bounds = array<i64: 2, 1>, scalar_prefetch = 0 : i64, scratch_operands = 1 : i64, tpu.core_type = #tpu.core_type<tc>, window_params = [{transform_indices = @transform_0, window_bounds = array<i64: 16, 32>}, {transform_indices = @transform_1, window_bounds = array<i64: 32, 128>}, {pipeline_mode = #tpu.pipeline_mode<synchronous>, transform_indices = @transform_2, window_bounds = array<i64: 1, 128>}, {transform_indices = @transform_3, window_bounds = array<i64: 16, 128>}]} {
    %c0_i32 = arith.constant 0 : i32
    %0 = arith.cmpi eq, %arg1, %c0_i32 : i32
    %1 = arith.extui %0 : i1 to i32
    %c0_i32_0 = arith.constant 0 : i32
    %2 = arith.cmpi ne, %1, %c0_i32_0 : i32
    scf.if %2 {
      %cst_10 = arith.constant 0.000000e+00 : f32
      %12 = vector.broadcast %cst_10 : f32 to vector<16x128xf32>
      %c0_11 = arith.constant 0 : index
      %c0_12 = arith.constant 0 : index
      %13 = vector.load %arg6[%c0_11, %c0_12] : memref<16x128xf32, #tpu.memory_space<vmem>>, vector<16x128xf32>
      tpu.vector_store %arg6[%c0_11, %c0_12], %12 {strides = array<i32>} : memref<16x128xf32, #tpu.memory_space<vmem>>, vector<16x128xf32>,
    } else {
    }
    %c0 = arith.constant 0 : index
    %c0_1 = arith.constant 0 : index
    %3 = vector.load %arg6[%c0, %c0_1] : memref<16x128xf32, #tpu.memory_space<vmem>>, vector<16x128xf32>
    %c0_2 = arith.constant 0 : index
    %c0_3 = arith.constant 0 : index
    %4 = vector.load %arg2[%c0_2, %c0_3] : memref<16x32xbf16, #tpu.memory_space<vmem>>, vector<16x32xbf16>
    %c0_4 = arith.constant 0 : index
    %c0_5 = arith.constant 0 : index
    %5 = vector.load %arg3[%c0_4, %c0_5] : memref<32x128xbf16, #tpu.memory_space<vmem>>, vector<32x128xbf16>
    %cst = arith.constant dense<0.000000e+00> : vector<16x128xf32>
    %6 = tpu.matmul %4, %5, %cst {dimension_numbers = #tpu.dot_dimension_numbers<[1], [0], [0], [1], [0, 0, 1, 1], [], []>} : vector<16x32xbf16>, vector<32x128xbf16>, vector<16x128xf32> -> vector<16x128xf32>
    %7 = arith.addf %3, %6 : vector<16x128xf32>
    %c0_6 = arith.constant 0 : index
    %c0_7 = arith.constant 0 : index
    %8 = vector.load %arg6[%c0_6, %c0_7] : memref<16x128xf32, #tpu.memory_space<vmem>>, vector<16x128xf32>
    tpu.vector_store %arg6[%c0_6, %c0_7], %7 {strides = array<i32>} : memref<16x128xf32, #tpu.memory_space<vmem>>, vector<16x128xf32>,
    %c0_i32_8 = arith.constant 0 : i32
    %9 = arith.cmpi eq, %arg1, %c0_i32_8 : i32
    %10 = arith.extui %9 : i1 to i32
    %c0_i32_9 = arith.constant 0 : i32
    %11 = arith.cmpi ne, %10, %c0_i32_9 : i32
    scf.if %11 {
      %c0_10 = arith.constant 0 : index
      %c0_11 = arith.constant 0 : index
      %12 = vector.load %arg6[%c0_10, %c0_11] : memref<16x128xf32, #tpu.memory_space<vmem>>, vector<16x128xf32>
      %c0_12 = arith.constant 0 : index
      %c0_13 = arith.constant 0 : index
      %13 = vector.load %arg4[%c0_12, %c0_13] : memref<1x128xf32, #tpu.memory_space<vmem>>, vector<1x128xf32>
      %14 = vector.broadcast %13 : vector<1x128xf32> to vector<16x128xf32>
      %15 = arith.addf %12, %14 : vector<16x128xf32>
      %cst_14 = arith.constant 0.000000e+00 : f32
      %16 = vector.broadcast %cst_14 : f32 to vector<16x128xf32>
      %17 = arith.maximumf %15, %16 : vector<16x128xf32>
      %18 = arith.truncf %17 : vector<16x128xf32> to vector<16x128xbf16>
      %c0_15 = arith.constant 0 : index
      %c0_16 = arith.constant 0 : index
      %19 = vector.load %arg5[%c0_15, %c0_16] : memref<16x128xbf16, #tpu.memory_space<vmem>>, vector<16x128xbf16>
      tpu.vector_store %arg5[%c0_15, %c0_16], %18 {strides = array<i32>} : memref<16x128xbf16, #tpu.memory_space<vmem>>, vector<16x128xbf16>,
    } else {
    }
    return
  }
  func.func @transform_0(%arg0: i32, %arg1: i32) -> (i32, i32) {
    %c0_i32 = arith.constant 0 : i32
    return %arg0, %arg1 : i32, i32
  }
  func.func @transform_1(%arg0: i32, %arg1: i32) -> (i32, i32) {
    %c0_i32 = arith.constant 0 : i32
    %c0_i32_0 = arith.constant 0 : i32
    return %arg1, %c0_i32 : i32, i32
  }
  func.func @transform_2(%arg0: i32, %arg1: i32) -> (i32, i32) {
    %c0_i32 = arith.constant 0 : i32
    %c0_i32_0 = arith.constant 0 : i32
    %c0_i32_1 = arith.constant 0 : i32
    return %c0_i32, %c0_i32_0 : i32, i32
  }
  func.func @transform_3(%arg0: i32, %arg1: i32) -> (i32, i32) {
    %c0_i32 = arith.constant 0 : i32
    %c0_i32_0 = arith.constant 0 : i32
    return %arg0, %c0_i32 : i32, i32
  }
}

module attributes {stable_mosaic.version = 11 : i64} {
  func.func @_project_kernel(%arg0: i32, %arg1: memref<16x128xbf16, #tpu.memory_space<vmem>>, %arg2: memref<128x128xbf16, #tpu.memory_space<vmem>>, %arg3: memref<16x128xbf16, #tpu.memory_space<vmem>>) attributes {dimension_semantics = [#tpu.dimension_semantics<parallel>], iteration_bounds = array<i64: 2>, scalar_prefetch = 0 : i64, scratch_operands = 0 : i64, tpu.core_type = #tpu.core_type<tc>, window_params = [{transform_indices = @transform_0, window_bounds = array<i64: 16, 128>}, {pipeline_mode = #tpu.pipeline_mode<synchronous>, transform_indices = @transform_1, window_bounds = array<i64: 128, 128>}, {transform_indices = @transform_2, window_bounds = array<i64: 16, 128>}]} {
    %c0 = arith.constant 0 : index
    %c0_0 = arith.constant 0 : index
    %0 = vector.load %arg1[%c0, %c0_0] : memref<16x128xbf16, #tpu.memory_space<vmem>>, vector<16x128xbf16>
    %c0_1 = arith.constant 0 : index
    %c0_2 = arith.constant 0 : index
    %1 = vector.load %arg2[%c0_1, %c0_2] : memref<128x128xbf16, #tpu.memory_space<vmem>>, vector<128x128xbf16>
    %cst = arith.constant dense<0.000000e+00> : vector<16x128xf32>
    %2 = tpu.matmul %0, %1, %cst {dimension_numbers = #tpu.dot_dimension_numbers<[1], [0], [0], [1], [0, 0, 1, 1], [], []>} : vector<16x128xbf16>, vector<128x128xbf16>, vector<16x128xf32> -> vector<16x128xf32>
    %3 = arith.truncf %2 : vector<16x128xf32> to vector<16x128xbf16>
    %c0_3 = arith.constant 0 : index
    %c0_4 = arith.constant 0 : index
    %4 = vector.load %arg3[%c0_3, %c0_4] : memref<16x128xbf16, #tpu.memory_space<vmem>>, vector<16x128xbf16>
    tpu.vector_store %arg3[%c0_3, %c0_4], %3 {strides = array<i32>} : memref<16x128xbf16, #tpu.memory_space<vmem>>, vector<16x128xbf16>,
    return
  }
  func.func @transform_0(%arg0: i32) -> (i32, i32) {
    %c0_i32 = arith.constant 0 : i32
    %c0_i32_0 = arith.constant 0 : i32
    return %arg0, %c0_i32 : i32, i32
  }
  func.func @transform_1(%arg0: i32) -> (i32, i32) {
    %c0_i32 = arith.constant 0 : i32
    %c0_i32_0 = arith.constant 0 : i32
    %c0_i32_1 = arith.constant 0 : i32
    return %c0_i32, %c0_i32_0 : i32, i32
  }
  func.func @transform_2(%arg0: i32) -> (i32, i32) {
    %c0_i32 = arith.constant 0 : i32
    %c0_i32_0 = arith.constant 0 : i32
    return %arg0, %c0_i32 : i32, i32
  }
}

module attributes {stable_mosaic.version = 11 : i64} {
  func.func @_aggregate_kernel(%arg0: i32, %arg1: i32, %arg2: memref<16x32xbf16, #tpu.memory_space<vmem>>, %arg3: memref<32x128xbf16, #tpu.memory_space<vmem>>, %arg4: memref<1x128xf32, #tpu.memory_space<vmem>>, %arg5: memref<16x128xf32, #tpu.memory_space<vmem>>, %arg6: memref<16x128xf32, #tpu.memory_space<vmem>>) attributes {dimension_semantics = [#tpu.dimension_semantics<parallel>, #tpu.dimension_semantics<arbitrary>], iteration_bounds = array<i64: 2, 1>, scalar_prefetch = 0 : i64, scratch_operands = 1 : i64, tpu.core_type = #tpu.core_type<tc>, window_params = [{transform_indices = @transform_0, window_bounds = array<i64: 16, 32>}, {transform_indices = @transform_1, window_bounds = array<i64: 32, 128>}, {pipeline_mode = #tpu.pipeline_mode<synchronous>, transform_indices = @transform_2, window_bounds = array<i64: 1, 128>}, {transform_indices = @transform_3, window_bounds = array<i64: 16, 128>}]} {
    %c0_i32 = arith.constant 0 : i32
    %0 = arith.cmpi eq, %arg1, %c0_i32 : i32
    %1 = arith.extui %0 : i1 to i32
    %c0_i32_0 = arith.constant 0 : i32
    %2 = arith.cmpi ne, %1, %c0_i32_0 : i32
    scf.if %2 {
      %cst_10 = arith.constant 0.000000e+00 : f32
      %12 = vector.broadcast %cst_10 : f32 to vector<16x128xf32>
      %c0_11 = arith.constant 0 : index
      %c0_12 = arith.constant 0 : index
      %13 = vector.load %arg6[%c0_11, %c0_12] : memref<16x128xf32, #tpu.memory_space<vmem>>, vector<16x128xf32>
      tpu.vector_store %arg6[%c0_11, %c0_12], %12 {strides = array<i32>} : memref<16x128xf32, #tpu.memory_space<vmem>>, vector<16x128xf32>,
    } else {
    }
    %c0 = arith.constant 0 : index
    %c0_1 = arith.constant 0 : index
    %3 = vector.load %arg6[%c0, %c0_1] : memref<16x128xf32, #tpu.memory_space<vmem>>, vector<16x128xf32>
    %c0_2 = arith.constant 0 : index
    %c0_3 = arith.constant 0 : index
    %4 = vector.load %arg2[%c0_2, %c0_3] : memref<16x32xbf16, #tpu.memory_space<vmem>>, vector<16x32xbf16>
    %c0_4 = arith.constant 0 : index
    %c0_5 = arith.constant 0 : index
    %5 = vector.load %arg3[%c0_4, %c0_5] : memref<32x128xbf16, #tpu.memory_space<vmem>>, vector<32x128xbf16>
    %cst = arith.constant dense<0.000000e+00> : vector<16x128xf32>
    %6 = tpu.matmul %4, %5, %cst {dimension_numbers = #tpu.dot_dimension_numbers<[1], [0], [0], [1], [0, 0, 1, 1], [], []>} : vector<16x32xbf16>, vector<32x128xbf16>, vector<16x128xf32> -> vector<16x128xf32>
    %7 = arith.addf %3, %6 : vector<16x128xf32>
    %c0_6 = arith.constant 0 : index
    %c0_7 = arith.constant 0 : index
    %8 = vector.load %arg6[%c0_6, %c0_7] : memref<16x128xf32, #tpu.memory_space<vmem>>, vector<16x128xf32>
    tpu.vector_store %arg6[%c0_6, %c0_7], %7 {strides = array<i32>} : memref<16x128xf32, #tpu.memory_space<vmem>>, vector<16x128xf32>,
    %c0_i32_8 = arith.constant 0 : i32
    %9 = arith.cmpi eq, %arg1, %c0_i32_8 : i32
    %10 = arith.extui %9 : i1 to i32
    %c0_i32_9 = arith.constant 0 : i32
    %11 = arith.cmpi ne, %10, %c0_i32_9 : i32
    scf.if %11 {
      %c0_10 = arith.constant 0 : index
      %c0_11 = arith.constant 0 : index
      %12 = vector.load %arg6[%c0_10, %c0_11] : memref<16x128xf32, #tpu.memory_space<vmem>>, vector<16x128xf32>
      %c0_12 = arith.constant 0 : index
      %c0_13 = arith.constant 0 : index
      %13 = vector.load %arg4[%c0_12, %c0_13] : memref<1x128xf32, #tpu.memory_space<vmem>>, vector<1x128xf32>
      %14 = vector.broadcast %13 : vector<1x128xf32> to vector<16x128xf32>
      %15 = arith.addf %12, %14 : vector<16x128xf32>
      %c0_14 = arith.constant 0 : index
      %c0_15 = arith.constant 0 : index
      %16 = vector.load %arg5[%c0_14, %c0_15] : memref<16x128xf32, #tpu.memory_space<vmem>>, vector<16x128xf32>
      tpu.vector_store %arg5[%c0_14, %c0_15], %15 {strides = array<i32>} : memref<16x128xf32, #tpu.memory_space<vmem>>, vector<16x128xf32>,
    } else {
    }
    return
  }
  func.func @transform_0(%arg0: i32, %arg1: i32) -> (i32, i32) {
    %c0_i32 = arith.constant 0 : i32
    return %arg0, %arg1 : i32, i32
  }
  func.func @transform_1(%arg0: i32, %arg1: i32) -> (i32, i32) {
    %c0_i32 = arith.constant 0 : i32
    %c0_i32_0 = arith.constant 0 : i32
    return %arg1, %c0_i32 : i32, i32
  }
  func.func @transform_2(%arg0: i32, %arg1: i32) -> (i32, i32) {
    %c0_i32 = arith.constant 0 : i32
    %c0_i32_0 = arith.constant 0 : i32
    %c0_i32_1 = arith.constant 0 : i32
    return %c0_i32, %c0_i32_0 : i32, i32
  }
  func.func @transform_3(%arg0: i32, %arg1: i32) -> (i32, i32) {
    %c0_i32 = arith.constant 0 : i32
    %c0_i32_0 = arith.constant 0 : i32
    return %arg0, %c0_i32 : i32, i32
  }
}

</mosaic_0001>

<llo_original>
// kernel: my_solute_gcn_forward.5
$region0: #{my_solute_gcn_forward.5}
  #allocation0 [shape = 'u32[]', space=smem, size = 0x4, offset = 0x4, fixed_abs, tag = 'smem constant byte address 0x4 - core index']
  #allocation1 [shape = 'u32[144,128]{1,0:T(1,128)}', space=vmem, size = 0x12000, scoped, tag = 'internal scratch']
  #allocation2 [shape = 'f32[16,128]{1,0:T(8,128)}', space=vmem, size = 0x2000, scoped, tag = 'scratch operand']
  %s0 = inlined_call_operand.vmem [shape: bf16[32,32], index: 0, kind: input, shape index: {}]
  %s1 = inlined_call_operand.vmem [shape: bf16[32,128], index: 1, kind: input, shape index: {}]
  %s2 = inlined_call_operand.vmem [shape: f32[1,128], index: 2, kind: input, shape index: {}]
  %s3 = inlined_call_operand.vmem [shape: bf16[32,128], index: 3, kind: output, shape index: {}]
  %s4 = sld [smem:[#allocation0]]
  $region53: #{my_solute_gcn_forward.5} parent=0
    _
  %s6 = ssub.s32 1, %s4
  %s7 = scalar_select 0, %s6, %s4
  loop: start=0, step=1, limit=4
  $region2: #{my_solute_gcn_forward.5} parent=0 // loop_pre_header
    _
  $region3: #{my_solute_gcn_forward.5} parent=0 // loop_header
    %s9 = sphi 0, %s13
    %p10 = scmp.ge.s32.totalorder %s9, 4
    %s16 = sphi 0, %s28
    %s17 = sphi 0, %s24
    %s18 = sphi 0, %s16
    %s19 = sphi 0, %s17
    %s20 = sphi 0, %s18
    %s21 = sphi 0, %s19
    %s33 = sphi 0, %s35
    %s36 = sphi 0, %s33
    %s37 = sphi 0, %s36
    %s53 = sphi 0, %s37
    %s59 = sphi 0, %s61
    %s62 = sphi 0, %s59
    %s63 = sphi 0, %s62
    %s79 = sphi 0, %s63
    %s83 = sphi 0, %s83
    %s85 = sphi 0, %s83
    %s86 = sphi 0, %s85
    %s100 = sphi 0, %s86
    %s106 = sphi 0, %s108
    %s109 = sphi 0, %s106
    %s110 = sphi 0, %s109
    %s126 = sphi 0, %s110
  $region4: #{my_solute_gcn_forward.5} parent=0 // loop_header_branch
    %12 = sbr.rel (%p10) target = $region8
  $region5: #{my_solute_gcn_forward.5} parent=0 // loop_body
    %s14 = ssub.s32 %s9, 1
    %s15 = ssub.s32 %s9, 2
    %s22 = sadd.s32 1, %s17
    %p23 = scmp.ge.s32.totalorder %s22, 1
    %s24 = scalar_select %p23, 0, %s22
    %s25 = sadd.s32 1, %s16
    %s26 = scalar_select %p23, %s25, %s16
    %p27 = scmp.ge.s32.totalorder %s26, 2
    %s28 = scalar_select %p27, 0, %s26
    %s29 = ssub.s32 %s16, %s28
    %s30 = ssub.s32 %s17, %s24
    %s31 = sor.u32 %s29, %s30
    %p32 = scmp.eq.s32.totalorder %s31, 0
    %s34 = sadd.s32 %s33, 1
    %s35 = scalar_select %p32, %s33, %s34
    %p38 = pneg %p32
    %p39 = scmp.eq.s32.totalorder %s9, 1
    %p40 = por %p38, %p39
    %p41 = scmp.ne.s32.totalorder %s33, %s36
    %p42 = scmp.eq.s32.totalorder %s9, 0
    %p43 = por %p41, %p42
    %p44 = scmp.ne.s32.totalorder %s33, %s36
    %p45 = scmp.eq.s32.totalorder %s14, 1
    %p46 = por %p44, %p45
    %p47 = scmp.ne.s32.totalorder %s36, %s37
    %p48 = scmp.eq.s32.totalorder %s14, 0
    %p49 = por %p47, %p48
    %p50 = scmp.ne.s32.totalorder %s36, %s37
    %p51 = scmp.eq.s32.totalorder %s15, 1
    %p52 = por %p50, %p51
    %p54 = scmp.ne.s32.totalorder %s37, %s53
    %p55 = scmp.eq.s32.totalorder %s15, 0
    %p56 = por %p54, %p55
    %s57 = ssub.s32 %s17, %s24
    %p58 = scmp.eq.s32.totalorder %s57, 0
    %s60 = sadd.s32 %s59, 1
    %s61 = scalar_select %p58, %s59, %s60
    %p64 = pneg %p58
    %p65 = scmp.eq.s32.totalorder %s9, 1
    %p66 = por %p64, %p65
    %p67 = scmp.ne.s32.totalorder %s59, %s62
    %p68 = scmp.eq.s32.totalorder %s9, 0
    %p69 = por %p67, %p68
    %p70 = scmp.ne.s32.totalorder %s59, %s62
    %p71 = scmp.eq.s32.totalorder %s14, 1
    %p72 = por %p70, %p71
    %p73 = scmp.ne.s32.totalorder %s62, %s63
    %p74 = scmp.eq.s32.totalorder %s14, 0
    %p75 = por %p73, %p74
    %p76 = scmp.ne.s32.totalorder %s62, %s63
    %p77 = scmp.eq.s32.totalorder %s15, 1
    %p78 = por %p76, %p77
    %p80 = scmp.ne.s32.totalorder %s63, %s79
    %p81 = scmp.eq.s32.totalorder %s15, 0
    %p82 = por %p80, %p81
    %s84 = sadd.s32 %s83, 1
    %p87 = scmp.eq.s32.totalorder %s9, 1
    %p88 = scmp.ne.s32.totalorder %s83, %s85
    %p89 = scmp.eq.s32.totalorder %s9, 0
    %p90 = por %p88, %p89
    %p91 = scmp.ne.s32.totalorder %s83, %s85
    %p92 = scmp.eq.s32.totalorder %s14, 1
    %p93 = por %p91, %p92
    %p94 = scmp.ne.s32.totalorder %s85, %s86
    %p95 = scmp.eq.s32.totalorder %s14, 0
    %p96 = por %p94, %p95
    %p97 = scmp.ne.s32.totalorder %s85, %s86
    %p98 = scmp.eq.s32.totalorder %s15, 1
    %p99 = por %p97, %p98
    %p101 = scmp.ne.s32.totalorder %s86, %s100
    %p102 = scmp.eq.s32.totalorder %s15, 0
    %p103 = por %p101, %p102
    %s104 = ssub.s32 %s16, %s28
    %p105 = scmp.eq.s32.totalorder %s104, 0
    %s107 = sadd.s32 %s106, 1
    %s108 = scalar_select %p105, %s106, %s107
    %p111 = pneg %p105
    %p112 = scmp.eq.s32.totalorder %s9, 1
    %p113 = por %p111, %p112
    %p114 = scmp.ne.s32.totalorder %s106, %s109
    %p115 = scmp.eq.s32.totalorder %s9, 0
    %p116 = por %p114, %p115
    %p117 = scmp.ne.s32.totalorder %s106, %s109
    %p118 = scmp.eq.s32.totalorder %s14, 1
    %p119 = por %p117, %p118
    %p120 = scmp.ne.s32.totalorder %s109, %s110
    %p121 = scmp.eq.s32.totalorder %s14, 0
    %p122 = por %p120, %p121
    %p123 = scmp.ne.s32.totalorder %s109, %s110
    %p124 = scmp.eq.s32.totalorder %s15, 1
    %p125 = por %p123, %p124
    %p127 = scmp.ne.s32.totalorder %s110, %s126
    %p128 = scmp.eq.s32.totalorder %s15, 0
    %p129 = por %p127, %p128
    %p130 = scmp.le.s32.totalorder 1, %s9
    %p131 = scmp.lt.s32.totalorder %s9, 3
    %p132 = pnand %p130, %p131
    %p133 = pneg %p132
    // Predicated region
    $region9: #{my_solute_gcn_forward.5} parent=5 // pred_check
      _
    $region10: #{my_solute_gcn_forward.5} parent=5 // pred_check_branch
      %135 = sbr.rel (%p132) target = $region12
    $region11: #{my_solute_gcn_forward.5} parent=5 // pred_region
      %s136 = ssub.s32 %s9, 1
      // Predicated region
      $region13: #{my_solute_gcn_forward.5} parent=11 // pred_check
        %p137 = pneg %p75
      $region14: #{my_solute_gcn_forward.5} parent=11 // pred_check_branch
        %139 = sbr.rel (%p137) target = $region16
      $region15: #{my_solute_gcn_forward.5} parent=11 // pred_region
        %s140 = smul.u32 4, %s19
        %p141 = scmp.lt.s32.totalorder %s140, 3
        %s142 = scalar_select %p141, %s140, 3
        %s143 = smul.addr %s142, 4
        %s144 = scalar_lea.vmem %s1, %s143
        %s145 = smul.u32 4, %s19
      $region16: #{my_solute_gcn_forward.5} parent=11 // pred_fallthru
        _
      // Predicated region
      $region17: #{my_solute_gcn_forward.5} parent=11 // pred_check
        %p146 = pneg %p96
      $region18: #{my_solute_gcn_forward.5} parent=11 // pred_check_branch
        %148 = sbr.rel (%p146) target = $region20
      $region19: #{my_solute_gcn_forward.5} parent=11 // pred_region
        _
      $region20: #{my_solute_gcn_forward.5} parent=11 // pred_fallthru
        _
    $region12: #{my_solute_gcn_forward.5} parent=5 // pred_fallthru
      _
    %p149 = scmp.lt.s32.totalorder %s9, 2
    // Predicated region
    $region21: #{my_solute_gcn_forward.5} parent=5 // pred_check
      %p150 = pneg %p149
    $region22: #{my_solute_gcn_forward.5} parent=5 // pred_check_branch
      %152 = sbr.rel (%p150) target = $region24
    $region23: #{my_solute_gcn_forward.5} parent=5 // pred_region
      // Predicated region
      $region25: #{my_solute_gcn_forward.5} parent=23 // pred_check
        %p153 = pneg %p43
      $region26: #{my_solute_gcn_forward.5} parent=23 // pred_check_branch
        %155 = sbr.rel (%p153) target = $region28
      $region27: #{my_solute_gcn_forward.5} parent=23 // pred_region
        %s156 = smul.u32 2, %s16
        %p157 = scmp.lt.s32.totalorder %s156, 3
        %s158 = scalar_select %p157, %s156, 3
        %p159 = scmp.lt.s32.totalorder %s17, 0
        %s160 = scalar_select %p159, %s17, 0
        %s161 = sadd.s32 %s160, %s158
        %s162 = smul.addr %s161, 4
        %s163 = scalar_lea.vmem %s0, %s162
        %s164 = smul.u32 2, %s16
      $region28: #{my_solute_gcn_forward.5} parent=23 // pred_fallthru
        _
    $region24: #{my_solute_gcn_forward.5} parent=5 // pred_fallthru
      _
    %p165 = scmp.le.s32.totalorder 1, %s9
    %p166 = scmp.lt.s32.totalorder %s9, 3
    %p167 = pnand %p165, %p166
    %p168 = pneg %p167
    // Predicated region
    $region29: #{my_solute_gcn_forward.5} parent=5 // pred_check
      _
    $region30: #{my_solute_gcn_forward.5} parent=5 // pred_check_branch
      %170 = sbr.rel (%p167) target = $region32
    $region31: #{my_solute_gcn_forward.5} parent=5 // pred_region
      %s171 = ssub.s32 %s9, 1
      %s172 = smul.u32 2, %s18
      %p173 = scmp.lt.s32.totalorder %s172, 3
      %s174 = scalar_select %p173, %s172, 3
      %p175 = scmp.lt.s32.totalorder %s19, 0
      %s176 = scalar_select %p175, %s19, 0
      %s177 = sadd.s32 %s176, %s174
      %s178 = smul.addr %s177, 4
      %s179 = scalar_lea.vmem %s0, %s178
      %p180 = pneg %p49
      %p181 = pneg %p46
      %s182 = smul.u32 4, %s19
      %p183 = scmp.lt.s32.totalorder %s182, 3
      %s184 = scalar_select %p183, %s182, 3
      %s185 = smul.addr %s184, 4
      %s186 = scalar_lea.vmem %s1, %s185
      %p187 = pneg %p75
      %p188 = pneg %p72
      %p189 = pneg %p96
      %p190 = pneg %p93
      %p191 = pneg %p122
      %p192 = pneg %p119
      %s193 = smul.u32 2, %s18
      %p194 = scmp.lt.s32.totalorder %s193, 3
      %s195 = scalar_select %p194, %s193, 3
      %s196 = smul.addr %s195, 4
      %s197 = scalar_lea.vmem %s3, %s196
      %s198 = smul.u32 2, %s18
      %p199 = scmp.lt.s32.totalorder %s198, 3
      %s200 = scalar_select %p199, %s198, 3
      %p201 = scmp.lt.s32.totalorder %s19, 0
      %s202 = scalar_select %p201, %s19, 0
      %s203 = sadd.s32 %s202, %s200
      %s204 = smul.addr %s203, 4
      %s205 = scalar_lea.vmem %s0, %s204
      %s206 = smul.u32 2, %s18
      %s207 = smul.u32 4, %s19
      %p208 = scmp.lt.s32.totalorder %s207, 3
      %s209 = scalar_select %p208, %s207, 3
      %s210 = smul.addr %s209, 4
      %s211 = scalar_lea.vmem %s1, %s210
      %s212 = smul.u32 4, %s19
      %s213 = smul.u32 2, %s18
      %p214 = scmp.lt.s32.totalorder %s213, 3
      %s215 = scalar_select %p214, %s213, 3
      %s216 = smul.addr %s215, 4
      %s217 = scalar_lea.vmem %s3, %s216
      %s218 = smul.u32 2, %s18
      %p220 = scmp.eq.s32.totalorder %s19, 0
      // Predicated region
      $region33: #{my_solute_gcn_forward.5} parent=31 // pred_check
        %p221 = pneg %p220
      $region34: #{my_solute_gcn_forward.5} parent=31 // pred_check_branch
        %223 = sbr.rel (%p221) target = $region36
      $region35: #{my_solute_gcn_forward.5} parent=31 // pred_region
        %224 = vst [vmem:[#allocation2] sm:$0xff] 0.0
        %225 = vst [vmem:[#allocation2 + $0x8] sm:$0xff] 0.0
      $region36: #{my_solute_gcn_forward.5} parent=31 // pred_fallthru
        _
      %v226 = vld [vmem:[#allocation2] sm:$0xff]
      %v227 = vld [vmem:[#allocation2 + $0x8] sm:$0xff]
      %v228 = vld [vmem:[%s205] sm:$0xf]
      %v229 = vld [vmem:[%s205 + $0x4] sm:$0xf]
      %v230 = vld [vmem:[%s211] sm:$0xf]
      %v231 = vld [vmem:[%s211 + $0x4] sm:$0xf]
      %v232 = vld [vmem:[%s211 + $0x8] sm:$0xf]
      %v233 = vld [vmem:[%s211 + $0xc] sm:$0xf]
      %v236 = vunpack.c.l.b16 %v228
      %v237 = vunpack.c.l.b16 %v229
      %v238 = vpack.c.b16 %v237, %v236
      %v243 = vunpack.c.l.b16 %v230
      %v244 = vunpack.c.l.b16 %v231
      %v245 = vunpack.c.l.b16 %v232
      %v246 = vunpack.c.l.b16 %v233
      %v247 = vpack.c.b16 %v244, %v243
      %v248 = vpack.c.b16 %v246, %v245
      %vm251 = vcmask 261120
      %v253 = vsel %vm251, %v238, 0
      %255 = vmatprep.subr.bf16.mxu0 0
      %256 = vmatpush1.bf16.msra.mxu0 0
      %257 = vmatprep.subr.bf16.mxu0 0
      %258 = vmatpush1.bf16.msra.mxu0 0
      %259 = vmatprep.subr.bf16.mxu0 0
      %260 = vmatpush1.bf16.msra.mxu0 0
      %261 = vmatprep.subr.bf16.mxu0 0
      %262 = vmatpush1.bf16.msra.mxu0 0
      %263 = vmatprep.subr.bf16.mxu0 0
      %264 = vmatpush1.bf16.msra.mxu0 0
      %265 = vmatprep.subr.bf16.mxu0 0
      %266 = vmatpush1.bf16.msra.mxu0 0
      %267 = vmatprep.subr.bf16.mxu0 0
      %268 = vmatpush1.bf16.msra.mxu0 %v248
      %269 = vmatprep.subr.bf16.mxu0 0
      %270 = vmatpush1.bf16.msra.mxu0 %v247
      %271 = vmatprep.subr.bf16.mxu0 0
      %272 = vmatpush2.bf16.msra.mxu0 0
      %273 = vmatprep.subr.bf16.mxu0 0
      %274 = vmatpush2.bf16.msra.mxu0 0
      %275 = vmatprep.subr.bf16.mxu0 0
      %276 = vmatpush2.bf16.msra.mxu0 0
      %277 = vmatprep.subr.bf16.mxu0 0
      %278 = vmatpush2.bf16.msra.mxu0 0
      %279 = vmatprep.subr.bf16.mxu0 0
      %280 = vmatpush2.bf16.msra.mxu0 0
      %281 = vmatprep.subr.bf16.mxu0 0
      %282 = vmatpush2.bf16.msra.mxu0 0
      %283 = vmatprep.subr.bf16.mxu0 0
      %284 = vmatpush2.bf16.msra.mxu0 0
      %285 = vmatprep.subr.bf16.mxu0 0
      %286 = vmatpush2.bf16.msra.mxu0 0
      %287 = vmatprep.mubr.bf16.mxu0 0
      %288 = vmatmul.mubr.bf16.gmra.mxu0 %v253
      %v289 = vpop.f32.mrf.mxu0
      %v290 = vadd.f32 0.0, %v289
      %v291 = vpop.f32.mrf.mxu0
      %v292 = vpop.f32.mrf.mxu0
      %v293 = vadd.f32 0.0, %v292
      %v294 = vpop.f32.mrf.mxu0
      %295 = vdwg.mxu0
      %v296 = vadd.f32 %v226, %v290
      %v297 = vadd.f32 %v227, %v293
      %298 = vst [vmem:[#allocation2] sm:$0xff] %v296
      %299 = vst [vmem:[#allocation2 + $0x8] sm:$0xff] %v297
      // Predicated region
      $region37: #{my_solute_gcn_forward.5} parent=31 // pred_check
        %p300 = pneg %p220
      $region38: #{my_solute_gcn_forward.5} parent=31 // pred_check_branch
        %302 = sbr.rel (%p300) target = $region40
      $region39: #{my_solute_gcn_forward.5} parent=31 // pred_region
        %v303 = vld [vmem:[#allocation2] sm:$0xff]
        %v304 = vld [vmem:[#allocation2 + $0x8] sm:$0xff]
        %v305 = vld [vmem:[%s2] sm:$0x1]
        %v307 = vlaneseq
        %v308 = vshrl.u32 %v307, 7
        %v309 = vsub.s32 0, %v308
        %v310 = vrot.slane %v305, %v309
        %v312 = vadd.f32 %v303, %v310
        %v313 = vadd.f32 %v304, %v310
        %v314 = vmax.f32 %v312, 0.0
        %v315 = vmax.f32 %v313, 0.0
        %v316 = vpack.c.bf16 %v315, %v314
        %v318 = vunpack.c.l.b16 %v316
        %v319 = vunpack.c.h.b16 %v316
        %v320 = vpack.c.b16 %v318, %v318
        %v321 = vpack.c.b16 %v319, %v319
        %324 = vst [vmem:[%s217] sm:$0xf] %v320
        %325 = vst [vmem:[%s217 + $0x4] sm:$0xf] %v321
      $region40: #{my_solute_gcn_forward.5} parent=31 // pred_fallthru
        _
      %s326 = smul.u32 2, %s18
      %p327 = scmp.lt.s32.totalorder %s326, 3
      %s328 = scalar_select %p327, %s326, 3
      %s329 = smul.addr %s328, 4
      %s330 = scalar_lea.vmem %s3, %s329
      // Predicated region
      $region41: #{my_solute_gcn_forward.5} parent=31 // pred_check
        %p331 = pneg %p119
      $region42: #{my_solute_gcn_forward.5} parent=31 // pred_check_branch
        %333 = sbr.rel (%p331) target = $region44
      $region43: #{my_solute_gcn_forward.5} parent=31 // pred_region
        %s334 = smul.u32 2, %s18
      $region44: #{my_solute_gcn_forward.5} parent=31 // pred_fallthru
        _
    $region32: #{my_solute_gcn_forward.5} parent=5 // pred_fallthru
      _
    %p335 = scmp.le.s32.totalorder 2, %s9
    // Predicated region
    $region45: #{my_solute_gcn_forward.5} parent=5 // pred_check
      %p336 = pneg %p335
    $region46: #{my_solute_gcn_forward.5} parent=5 // pred_check_branch
      %338 = sbr.rel (%p336) target = $region48
    $region47: #{my_solute_gcn_forward.5} parent=5 // pred_region
      %s339 = ssub.s32 %s9, 2
      // Predicated region
      $region49: #{my_solute_gcn_forward.5} parent=47 // pred_check
        %p340 = pneg %p125
      $region50: #{my_solute_gcn_forward.5} parent=47 // pred_check_branch
        %342 = sbr.rel (%p340) target = $region52
      $region51: #{my_solute_gcn_forward.5} parent=47 // pred_region
        %s343 = smul.u32 2, %s20
        %p344 = scmp.lt.s32.totalorder %s343, 3
        %s345 = scalar_select %p344, %s343, 3
        %s346 = smul.addr %s345, 4
        %s347 = scalar_lea.vmem %s3, %s346
      $region52: #{my_solute_gcn_forward.5} parent=47 // pred_fallthru
        _
    $region48: #{my_solute_gcn_forward.5} parent=5 // pred_fallthru
      _
  $region6: #{my_solute_gcn_forward.5} parent=0 // loop_footer
    %s13 = sadd.s32 1, %s9
  $region7: #{my_solute_gcn_forward.5} parent=0 // loop_footer_branch
    %8 = sbr.rel target = $region3
  $region8: #{my_solute_gcn_forward.5} parent=0 // loop_exit
    _

// kernel: my_solute_gcn_forward.7
$region0: #{my_solute_gcn_forward.7}
  #allocation0 [shape = 'u32[]', space=smem, size = 0x4, offset = 0x4, fixed_abs, tag = 'smem constant byte address 0x4 - core index']
  #allocation1 [shape = 'u32[144,128]{1,0:T(1,128)}', space=vmem, size = 0x12000, scoped, tag = 'internal scratch']
  #allocation2 [shape = 'f32[16,128]{1,0:T(8,128)}', space=vmem, size = 0x2000, scoped, tag = 'scratch operand']
  %s0 = inlined_call_operand.vmem [shape: bf16[32,32], index: 0, kind: input, shape index: {}]
  %s1 = inlined_call_operand.vmem [shape: bf16[32,128], index: 1, kind: input, shape index: {}]
  %s2 = inlined_call_operand.vmem [shape: f32[1,128], index: 2, kind: input, shape index: {}]
  %s3 = inlined_call_operand.vmem [shape: f32[32,128], index: 3, kind: output, shape index: {}]
  %s4 = sld [smem:[#allocation0]]
  $region53: #{my_solute_gcn_forward.7} parent=0
    _
  %s6 = ssub.s32 1, %s4
  %s7 = scalar_select 0, %s6, %s4
  loop: start=0, step=1, limit=4
  $region2: #{my_solute_gcn_forward.7} parent=0 // loop_pre_header
    _
  $region3: #{my_solute_gcn_forward.7} parent=0 // loop_header
    %s9 = sphi 0, %s13
    %p10 = scmp.ge.s32.totalorder %s9, 4
    %s16 = sphi 0, %s28
    %s17 = sphi 0, %s24
    %s18 = sphi 0, %s16
    %s19 = sphi 0, %s17
    %s20 = sphi 0, %s18
    %s21 = sphi 0, %s19
    %s33 = sphi 0, %s35
    %s36 = sphi 0, %s33
    %s37 = sphi 0, %s36
    %s53 = sphi 0, %s37
    %s59 = sphi 0, %s61
    %s62 = sphi 0, %s59
    %s63 = sphi 0, %s62
    %s79 = sphi 0, %s63
    %s83 = sphi 0, %s83
    %s85 = sphi 0, %s83
    %s86 = sphi 0, %s85
    %s100 = sphi 0, %s86
    %s106 = sphi 0, %s108
    %s109 = sphi 0, %s106
    %s110 = sphi 0, %s109
    %s126 = sphi 0, %s110
  $region4: #{my_solute_gcn_forward.7} parent=0 // loop_header_branch
    %12 = sbr.rel (%p10) target = $region8
  $region5: #{my_solute_gcn_forward.7} parent=0 // loop_body
    %s14 = ssub.s32 %s9, 1
    %s15 = ssub.s32 %s9, 2
    %s22 = sadd.s32 1, %s17
    %p23 = scmp.ge.s32.totalorder %s22, 1
    %s24 = scalar_select %p23, 0, %s22
    %s25 = sadd.s32 1, %s16
    %s26 = scalar_select %p23, %s25, %s16
    %p27 = scmp.ge.s32.totalorder %s26, 2
    %s28 = scalar_select %p27, 0, %s26
    %s29 = ssub.s32 %s16, %s28
    %s30 = ssub.s32 %s17, %s24
    %s31 = sor.u32 %s29, %s30
    %p32 = scmp.eq.s32.totalorder %s31, 0
    %s34 = sadd.s32 %s33, 1
    %s35 = scalar_select %p32, %s33, %s34
    %p38 = pneg %p32
    %p39 = scmp.eq.s32.totalorder %s9, 1
    %p40 = por %p38, %p39
    %p41 = scmp.ne.s32.totalorder %s33, %s36
    %p42 = scmp.eq.s32.totalorder %s9, 0
    %p43 = por %p41, %p42
    %p44 = scmp.ne.s32.totalorder %s33, %s36
    %p45 = scmp.eq.s32.totalorder %s14, 1
    %p46 = por %p44, %p45
    %p47 = scmp.ne.s32.totalorder %s36, %s37
    %p48 = scmp.eq.s32.totalorder %s14, 0
    %p49 = por %p47, %p48
    %p50 = scmp.ne.s32.totalorder %s36, %s37
    %p51 = scmp.eq.s32.totalorder %s15, 1
    %p52 = por %p50, %p51
    %p54 = scmp.ne.s32.totalorder %s37, %s53
    %p55 = scmp.eq.s32.totalorder %s15, 0
    %p56 = por %p54, %p55
    %s57 = ssub.s32 %s17, %s24
    %p58 = scmp.eq.s32.totalorder %s57, 0
    %s60 = sadd.s32 %s59, 1
    %s61 = scalar_select %p58, %s59, %s60
    %p64 = pneg %p58
    %p65 = scmp.eq.s32.totalorder %s9, 1
    %p66 = por %p64, %p65
    %p67 = scmp.ne.s32.totalorder %s59, %s62
    %p68 = scmp.eq.s32.totalorder %s9, 0
    %p69 = por %p67, %p68
    %p70 = scmp.ne.s32.totalorder %s59, %s62
    %p71 = scmp.eq.s32.totalorder %s14, 1
    %p72 = por %p70, %p71
    %p73 = scmp.ne.s32.totalorder %s62, %s63
    %p74 = scmp.eq.s32.totalorder %s14, 0
    %p75 = por %p73, %p74
    %p76 = scmp.ne.s32.totalorder %s62, %s63
    %p77 = scmp.eq.s32.totalorder %s15, 1
    %p78 = por %p76, %p77
    %p80 = scmp.ne.s32.totalorder %s63, %s79
    %p81 = scmp.eq.s32.totalorder %s15, 0
    %p82 = por %p80, %p81
    %s84 = sadd.s32 %s83, 1
    %p87 = scmp.eq.s32.totalorder %s9, 1
    %p88 = scmp.ne.s32.totalorder %s83, %s85
    %p89 = scmp.eq.s32.totalorder %s9, 0
    %p90 = por %p88, %p89
    %p91 = scmp.ne.s32.totalorder %s83, %s85
    %p92 = scmp.eq.s32.totalorder %s14, 1
    %p93 = por %p91, %p92
    %p94 = scmp.ne.s32.totalorder %s85, %s86
    %p95 = scmp.eq.s32.totalorder %s14, 0
    %p96 = por %p94, %p95
    %p97 = scmp.ne.s32.totalorder %s85, %s86
    %p98 = scmp.eq.s32.totalorder %s15, 1
    %p99 = por %p97, %p98
    %p101 = scmp.ne.s32.totalorder %s86, %s100
    %p102 = scmp.eq.s32.totalorder %s15, 0
    %p103 = por %p101, %p102
    %s104 = ssub.s32 %s16, %s28
    %p105 = scmp.eq.s32.totalorder %s104, 0
    %s107 = sadd.s32 %s106, 1
    %s108 = scalar_select %p105, %s106, %s107
    %p111 = pneg %p105
    %p112 = scmp.eq.s32.totalorder %s9, 1
    %p113 = por %p111, %p112
    %p114 = scmp.ne.s32.totalorder %s106, %s109
    %p115 = scmp.eq.s32.totalorder %s9, 0
    %p116 = por %p114, %p115
    %p117 = scmp.ne.s32.totalorder %s106, %s109
    %p118 = scmp.eq.s32.totalorder %s14, 1
    %p119 = por %p117, %p118
    %p120 = scmp.ne.s32.totalorder %s109, %s110
    %p121 = scmp.eq.s32.totalorder %s14, 0
    %p122 = por %p120, %p121
    %p123 = scmp.ne.s32.totalorder %s109, %s110
    %p124 = scmp.eq.s32.totalorder %s15, 1
    %p125 = por %p123, %p124
    %p127 = scmp.ne.s32.totalorder %s110, %s126
    %p128 = scmp.eq.s32.totalorder %s15, 0
    %p129 = por %p127, %p128
    %p130 = scmp.le.s32.totalorder 1, %s9
    %p131 = scmp.lt.s32.totalorder %s9, 3
    %p132 = pnand %p130, %p131
    %p133 = pneg %p132
    // Predicated region
    $region9: #{my_solute_gcn_forward.7} parent=5 // pred_check
      _
    $region10: #{my_solute_gcn_forward.7} parent=5 // pred_check_branch
      %135 = sbr.rel (%p132) target = $region12
    $region11: #{my_solute_gcn_forward.7} parent=5 // pred_region
      %s136 = ssub.s32 %s9, 1
      // Predicated region
      $region13: #{my_solute_gcn_forward.7} parent=11 // pred_check
        %p137 = pneg %p75
      $region14: #{my_solute_gcn_forward.7} parent=11 // pred_check_branch
        %139 = sbr.rel (%p137) target = $region16
      $region15: #{my_solute_gcn_forward.7} parent=11 // pred_region
        %s140 = smul.u32 4, %s19
        %p141 = scmp.lt.s32.totalorder %s140, 3
        %s142 = scalar_select %p141, %s140, 3
        %s143 = smul.addr %s142, 4
        %s144 = scalar_lea.vmem %s1, %s143
        %s145 = smul.u32 4, %s19
      $region16: #{my_solute_gcn_forward.7} parent=11 // pred_fallthru
        _
      // Predicated region
      $region17: #{my_solute_gcn_forward.7} parent=11 // pred_check
        %p146 = pneg %p96
      $region18: #{my_solute_gcn_forward.7} parent=11 // pred_check_branch
        %148 = sbr.rel (%p146) target = $region20
      $region19: #{my_solute_gcn_forward.7} parent=11 // pred_region
        _
      $region20: #{my_solute_gcn_forward.7} parent=11 // pred_fallthru
        _
    $region12: #{my_solute_gcn_forward.7} parent=5 // pred_fallthru
      _
    %p149 = scmp.lt.s32.totalorder %s9, 2
    // Predicated region
    $region21: #{my_solute_gcn_forward.7} parent=5 // pred_check
      %p150 = pneg %p149
    $region22: #{my_solute_gcn_forward.7} parent=5 // pred_check_branch
      %152 = sbr.rel (%p150) target = $region24
    $region23: #{my_solute_gcn_forward.7} parent=5 // pred_region
      // Predicated region
      $region25: #{my_solute_gcn_forward.7} parent=23 // pred_check
        %p153 = pneg %p43
      $region26: #{my_solute_gcn_forward.7} parent=23 // pred_check_branch
        %155 = sbr.rel (%p153) target = $region28
      $region27: #{my_solute_gcn_forward.7} parent=23 // pred_region
        %s156 = smul.u32 2, %s16
        %p157 = scmp.lt.s32.totalorder %s156, 3
        %s158 = scalar_select %p157, %s156, 3
        %p159 = scmp.lt.s32.totalorder %s17, 0
        %s160 = scalar_select %p159, %s17, 0
        %s161 = sadd.s32 %s160, %s158
        %s162 = smul.addr %s161, 4
        %s163 = scalar_lea.vmem %s0, %s162
        %s164 = smul.u32 2, %s16
      $region28: #{my_solute_gcn_forward.7} parent=23 // pred_fallthru
        _
    $region24: #{my_solute_gcn_forward.7} parent=5 // pred_fallthru
      _
    %p165 = scmp.le.s32.totalorder 1, %s9
    %p166 = scmp.lt.s32.totalorder %s9, 3
    %p167 = pnand %p165, %p166
    %p168 = pneg %p167
    // Predicated region
    $region29: #{my_solute_gcn_forward.7} parent=5 // pred_check
      _
    $region30: #{my_solute_gcn_forward.7} parent=5 // pred_check_branch
      %170 = sbr.rel (%p167) target = $region32
    $region31: #{my_solute_gcn_forward.7} parent=5 // pred_region
      %s171 = ssub.s32 %s9, 1
      %s172 = smul.u32 2, %s18
      %p173 = scmp.lt.s32.totalorder %s172, 3
      %s174 = scalar_select %p173, %s172, 3
      %p175 = scmp.lt.s32.totalorder %s19, 0
      %s176 = scalar_select %p175, %s19, 0
      %s177 = sadd.s32 %s176, %s174
      %s178 = smul.addr %s177, 4
      %s179 = scalar_lea.vmem %s0, %s178
      %p180 = pneg %p49
      %p181 = pneg %p46
      %s182 = smul.u32 4, %s19
      %p183 = scmp.lt.s32.totalorder %s182, 3
      %s184 = scalar_select %p183, %s182, 3
      %s185 = smul.addr %s184, 4
      %s186 = scalar_lea.vmem %s1, %s185
      %p187 = pneg %p75
      %p188 = pneg %p72
      %p189 = pneg %p96
      %p190 = pneg %p93
      %p191 = pneg %p122
      %p192 = pneg %p119
      %s193 = smul.u32 2, %s18
      %p194 = scmp.lt.s32.totalorder %s193, 3
      %s195 = scalar_select %p194, %s193, 3
      %s196 = smul.addr %s195, 8
      %s197 = scalar_lea.vmem %s3, %s196
      %s198 = smul.u32 2, %s18
      %p199 = scmp.lt.s32.totalorder %s198, 3
      %s200 = scalar_select %p199, %s198, 3
      %p201 = scmp.lt.s32.totalorder %s19, 0
      %s202 = scalar_select %p201, %s19, 0
      %s203 = sadd.s32 %s202, %s200
      %s204 = smul.addr %s203, 4
      %s205 = scalar_lea.vmem %s0, %s204
      %s206 = smul.u32 2, %s18
      %s207 = smul.u32 4, %s19
      %p208 = scmp.lt.s32.totalorder %s207, 3
      %s209 = scalar_select %p208, %s207, 3
      %s210 = smul.addr %s209, 4
      %s211 = scalar_lea.vmem %s1, %s210
      %s212 = smul.u32 4, %s19
      %s213 = smul.u32 2, %s18
      %p214 = scmp.lt.s32.totalorder %s213, 3
      %s215 = scalar_select %p214, %s213, 3
      %s216 = smul.addr %s215, 8
      %s217 = scalar_lea.vmem %s3, %s216
      %s218 = smul.u32 2, %s18
      %p220 = scmp.eq.s32.totalorder %s19, 0
      // Predicated region
      $region33: #{my_solute_gcn_forward.7} parent=31 // pred_check
        %p221 = pneg %p220
      $region34: #{my_solute_gcn_forward.7} parent=31 // pred_check_branch
        %223 = sbr.rel (%p221) target = $region36
      $region35: #{my_solute_gcn_forward.7} parent=31 // pred_region
        %224 = vst [vmem:[#allocation2] sm:$0xff] 0.0
        %225 = vst [vmem:[#allocation2 + $0x8] sm:$0xff] 0.0
      $region36: #{my_solute_gcn_forward.7} parent=31 // pred_fallthru
        _
      %v226 = vld [vmem:[#allocation2] sm:$0xff]
      %v227 = vld [vmem:[#allocation2 + $0x8] sm:$0xff]
      %v228 = vld [vmem:[%s205] sm:$0xf]
      %v229 = vld [vmem:[%s205 + $0x4] sm:$0xf]
      %v230 = vld [vmem:[%s211] sm:$0xf]
      %v231 = vld [vmem:[%s211 + $0x4] sm:$0xf]
      %v232 = vld [vmem:[%s211 + $0x8] sm:$0xf]
      %v233 = vld [vmem:[%s211 + $0xc] sm:$0xf]
      %v236 = vunpack.c.l.b16 %v228
      %v237 = vunpack.c.l.b16 %v229
      %v238 = vpack.c.b16 %v237, %v236
      %v243 = vunpack.c.l.b16 %v230
      %v244 = vunpack.c.l.b16 %v231
      %v245 = vunpack.c.l.b16 %v232
      %v246 = vunpack.c.l.b16 %v233
      %v247 = vpack.c.b16 %v244, %v243
      %v248 = vpack.c.b16 %v246, %v245
      %vm251 = vcmask 261120
      %v253 = vsel %vm251, %v238, 0
      %255 = vmatprep.subr.bf16.mxu0 0
      %256 = vmatpush1.bf16.msra.mxu0 0
      %257 = vmatprep.subr.bf16.mxu0 0
      %258 = vmatpush1.bf16.msra.mxu0 0
      %259 = vmatprep.subr.bf16.mxu0 0
      %260 = vmatpush1.bf16.msra.mxu0 0
      %261 = vmatprep.subr.bf16.mxu0 0
      %262 = vmatpush1.bf16.msra.mxu0 0
      %263 = vmatprep.subr.bf16.mxu0 0
      %264 = vmatpush1.bf16.msra.mxu0 0
      %265 = vmatprep.subr.bf16.mxu0 0
      %266 = vmatpush1.bf16.msra.mxu0 0
      %267 = vmatprep.subr.bf16.mxu0 0
      %268 = vmatpush1.bf16.msra.mxu0 %v248
      %269 = vmatprep.subr.bf16.mxu0 0
      %270 = vmatpush1.bf16.msra.mxu0 %v247
      %271 = vmatprep.subr.bf16.mxu0 0
      %272 = vmatpush2.bf16.msra.mxu0 0
      %273 = vmatprep.subr.bf16.mxu0 0
      %274 = vmatpush2.bf16.msra.mxu0 0
      %275 = vmatprep.subr.bf16.mxu0 0
      %276 = vmatpush2.bf16.msra.mxu0 0
      %277 = vmatprep.subr.bf16.mxu0 0
      %278 = vmatpush2.bf16.msra.mxu0 0
      %279 = vmatprep.subr.bf16.mxu0 0
      %280 = vmatpush2.bf16.msra.mxu0 0
      %281 = vmatprep.subr.bf16.mxu0 0
      %282 = vmatpush2.bf16.msra.mxu0 0
      %283 = vmatprep.subr.bf16.mxu0 0
      %284 = vmatpush2.bf16.msra.mxu0 0
      %285 = vmatprep.subr.bf16.mxu0 0
      %286 = vmatpush2.bf16.msra.mxu0 0
      %287 = vmatprep.mubr.bf16.mxu0 0
      %288 = vmatmul.mubr.bf16.gmra.mxu0 %v253
      %v289 = vpop.f32.mrf.mxu0
      %v290 = vadd.f32 0.0, %v289
      %v291 = vpop.f32.mrf.mxu0
      %v292 = vpop.f32.mrf.mxu0
      %v293 = vadd.f32 0.0, %v292
      %v294 = vpop.f32.mrf.mxu0
      %295 = vdwg.mxu0
      %v296 = vadd.f32 %v226, %v290
      %v297 = vadd.f32 %v227, %v293
      %298 = vst [vmem:[#allocation2] sm:$0xff] %v296
      %299 = vst [vmem:[#allocation2 + $0x8] sm:$0xff] %v297
      // Predicated region
      $region37: #{my_solute_gcn_forward.7} parent=31 // pred_check
        %p300 = pneg %p220
      $region38: #{my_solute_gcn_forward.7} parent=31 // pred_check_branch
        %302 = sbr.rel (%p300) target = $region40
      $region39: #{my_solute_gcn_forward.7} parent=31 // pred_region
        %v303 = vld [vmem:[#allocation2] sm:$0xff]
        %v304 = vld [vmem:[#allocation2 + $0x8] sm:$0xff]
        %v305 = vld [vmem:[%s2] sm:$0x1]
        %v307 = vlaneseq
        %v308 = vshrl.u32 %v307, 7
        %v309 = vsub.s32 0, %v308
        %v310 = vrot.slane %v305, %v309
        %v312 = vadd.f32 %v303, %v310
        %v313 = vadd.f32 %v304, %v310
        %314 = vst [vmem:[%s217] sm:$0xff] %v312
        %315 = vst [vmem:[%s217 + $0x8] sm:$0xff] %v313
      $region40: #{my_solute_gcn_forward.7} parent=31 // pred_fallthru
        _
      %s316 = smul.u32 2, %s18
      %p317 = scmp.lt.s32.totalorder %s316, 3
      %s318 = scalar_select %p317, %s316, 3
      %s319 = smul.addr %s318, 8
      %s320 = scalar_lea.vmem %s3, %s319
      // Predicated region
      $region41: #{my_solute_gcn_forward.7} parent=31 // pred_check
        %p321 = pneg %p119
      $region42: #{my_solute_gcn_forward.7} parent=31 // pred_check_branch
        %323 = sbr.rel (%p321) target = $region44
      $region43: #{my_solute_gcn_forward.7} parent=31 // pred_region
        %s324 = smul.u32 2, %s18
      $region44: #{my_solute_gcn_forward.7} parent=31 // pred_fallthru
        _
    $region32: #{my_solute_gcn_forward.7} parent=5 // pred_fallthru
      _
    %p325 = scmp.le.s32.totalorder 2, %s9
    // Predicated region
    $region45: #{my_solute_gcn_forward.7} parent=5 // pred_check
      %p326 = pneg %p325
    $region46: #{my_solute_gcn_forward.7} parent=5 // pred_check_branch
      %328 = sbr.rel (%p326) target = $region48
    $region47: #{my_solute_gcn_forward.7} parent=5 // pred_region
      %s329 = ssub.s32 %s9, 2
      // Predicated region
      $region49: #{my_solute_gcn_forward.7} parent=47 // pred_check
        %p330 = pneg %p125
      $region50: #{my_solute_gcn_forward.7} parent=47 // pred_check_branch
        %332 = sbr.rel (%p330) target = $region52
      $region51: #{my_solute_gcn_forward.7} parent=47 // pred_region
        %s333 = smul.u32 2, %s20
        %p334 = scmp.lt.s32.totalorder %s333, 3
        %s335 = scalar_select %p334, %s333, 3
        %s336 = smul.addr %s335, 8
        %s337 = scalar_lea.vmem %s3, %s336
      $region52: #{my_solute_gcn_forward.7} parent=47 // pred_fallthru
        _
    $region48: #{my_solute_gcn_forward.7} parent=5 // pred_fallthru
      _
  $region6: #{my_solute_gcn_forward.7} parent=0 // loop_footer
    %s13 = sadd.s32 1, %s9
  $region7: #{my_solute_gcn_forward.7} parent=0 // loop_footer_branch
    %8 = sbr.rel target = $region3
  $region8: #{my_solute_gcn_forward.7} parent=0 // loop_exit
    _

// kernel: my_solute_gcn_forward.4
$region0: #{my_solute_gcn_forward.4}
  #allocation0 [shape = 'u32[]', space=smem, size = 0x4, offset = 0x4, fixed_abs, tag = 'smem constant byte address 0x4 - core index']
  #allocation1 [shape = 'u32[144,128]{1,0:T(1,128)}', space=vmem, size = 0x12000, scoped, tag = 'internal scratch']
  %s0 = inlined_call_operand.vmem [shape: bf16[32,128], index: 0, kind: input, shape index: {}]
  %s1 = inlined_call_operand.vmem [shape: bf16[128,128], index: 1, kind: input, shape index: {}]
  %s2 = inlined_call_operand.vmem [shape: bf16[32,128], index: 2, kind: output, shape index: {}]
  %s3 = sld [smem:[#allocation0]]
  $region41: #{my_solute_gcn_forward.4} parent=0
    _
  %s5 = ssub.s32 1, %s3
  %s6 = scalar_select 0, %s5, %s3
  loop: start=0, step=1, limit=4
  $region2: #{my_solute_gcn_forward.4} parent=0 // loop_pre_header
    _
  $region3: #{my_solute_gcn_forward.4} parent=0 // loop_header
    %s8 = sphi 0, %s12
    %p9 = scmp.ge.s32.totalorder %s8, 4
    %s18 = sphi 0, %s20
    %s21 = sphi 0, %s18
    %s22 = sphi 0, %s21
    %s38 = sphi 0, %s22
    %s42 = sphi 0, %s42
    %s44 = sphi 0, %s42
    %s45 = sphi 0, %s44
    %s59 = sphi 0, %s45
    %s65 = sphi 0, %s67
    %s68 = sphi 0, %s65
    %s69 = sphi 0, %s68
    %s85 = sphi 0, %s69
  $region4: #{my_solute_gcn_forward.4} parent=0 // loop_header_branch
    %11 = sbr.rel (%p9) target = $region8
  $region5: #{my_solute_gcn_forward.4} parent=0 // loop_body
    %s13 = ssub.s32 %s8, 1
    %s14 = ssub.s32 %s8, 2
    %s15 = sadd.s32 %s8, 1
    %s16 = ssub.s32 %s8, %s15
    %p17 = scmp.eq.s32.totalorder %s16, 0
    %s19 = sadd.s32 %s18, 1
    %s20 = scalar_select %p17, %s18, %s19
    %p23 = pneg %p17
    %p24 = scmp.eq.s32.totalorder %s8, 1
    %p25 = por %p23, %p24
    %p26 = scmp.ne.s32.totalorder %s18, %s21
    %p27 = scmp.eq.s32.totalorder %s8, 0
    %p28 = por %p26, %p27
    %p29 = scmp.ne.s32.totalorder %s18, %s21
    %p30 = scmp.eq.s32.totalorder %s13, 1
    %p31 = por %p29, %p30
    %p32 = scmp.ne.s32.totalorder %s21, %s22
    %p33 = scmp.eq.s32.totalorder %s13, 0
    %p34 = por %p32, %p33
    %p35 = scmp.ne.s32.totalorder %s21, %s22
    %p36 = scmp.eq.s32.totalorder %s14, 1
    %p37 = por %p35, %p36
    %p39 = scmp.ne.s32.totalorder %s22, %s38
    %p40 = scmp.eq.s32.totalorder %s14, 0
    %p41 = por %p39, %p40
    %s43 = sadd.s32 %s42, 1
    %p46 = scmp.eq.s32.totalorder %s8, 1
    %p47 = scmp.ne.s32.totalorder %s42, %s44
    %p48 = scmp.eq.s32.totalorder %s8, 0
    %p49 = por %p47, %p48
    %p50 = scmp.ne.s32.totalorder %s42, %s44
    %p51 = scmp.eq.s32.totalorder %s13, 1
    %p52 = por %p50, %p51
    %p53 = scmp.ne.s32.totalorder %s44, %s45
    %p54 = scmp.eq.s32.totalorder %s13, 0
    %p55 = por %p53, %p54
    %p56 = scmp.ne.s32.totalorder %s44, %s45
    %p57 = scmp.eq.s32.totalorder %s14, 1
    %p58 = por %p56, %p57
    %p60 = scmp.ne.s32.totalorder %s45, %s59
    %p61 = scmp.eq.s32.totalorder %s14, 0
    %p62 = por %p60, %p61
    %s63 = ssub.s32 %s8, %s15
    %p64 = scmp.eq.s32.totalorder %s63, 0
    %s66 = sadd.s32 %s65, 1
    %s67 = scalar_select %p64, %s65, %s66
    %p70 = pneg %p64
    %p71 = scmp.eq.s32.totalorder %s8, 1
    %p72 = por %p70, %p71
    %p73 = scmp.ne.s32.totalorder %s65, %s68
    %p74 = scmp.eq.s32.totalorder %s8, 0
    %p75 = por %p73, %p74
    %p76 = scmp.ne.s32.totalorder %s65, %s68
    %p77 = scmp.eq.s32.totalorder %s13, 1
    %p78 = por %p76, %p77
    %p79 = scmp.ne.s32.totalorder %s68, %s69
    %p80 = scmp.eq.s32.totalorder %s13, 0
    %p81 = por %p79, %p80
    %p82 = scmp.ne.s32.totalorder %s68, %s69
    %p83 = scmp.eq.s32.totalorder %s14, 1
    %p84 = por %p82, %p83
    %p86 = scmp.ne.s32.totalorder %s69, %s85
    %p87 = scmp.eq.s32.totalorder %s14, 0
    %p88 = por %p86, %p87
    %p89 = scmp.le.s32.totalorder 1, %s8
    %p90 = scmp.lt.s32.totalorder %s8, 3
    %p91 = pnand %p89, %p90
    %p92 = pneg %p91
    // Predicated region
    $region9: #{my_solute_gcn_forward.4} parent=5 // pred_check
      _
    $region10: #{my_solute_gcn_forward.4} parent=5 // pred_check_branch
      %94 = sbr.rel (%p91) target = $region12
    $region11: #{my_solute_gcn_forward.4} parent=5 // pred_region
      %s95 = ssub.s32 %s8, 1
      // Predicated region
      $region13: #{my_solute_gcn_forward.4} parent=11 // pred_check
        %p96 = pneg %p55
      $region14: #{my_solute_gcn_forward.4} parent=11 // pred_check_branch
        %98 = sbr.rel (%p96) target = $region16
      $region15: #{my_solute_gcn_forward.4} parent=11 // pred_region
        _
      $region16: #{my_solute_gcn_forward.4} parent=11 // pred_fallthru
        _
    $region12: #{my_solute_gcn_forward.4} parent=5 // pred_fallthru
      _
    %p99 = scmp.lt.s32.totalorder %s8, 2
    // Predicated region
    $region17: #{my_solute_gcn_forward.4} parent=5 // pred_check
      %p100 = pneg %p99
    $region18: #{my_solute_gcn_forward.4} parent=5 // pred_check_branch
      %102 = sbr.rel (%p100) target = $region20
    $region19: #{my_solute_gcn_forward.4} parent=5 // pred_region
      // Predicated region
      $region21: #{my_solute_gcn_forward.4} parent=19 // pred_check
        %p103 = pneg %p28
      $region22: #{my_solute_gcn_forward.4} parent=19 // pred_check_branch
        %105 = sbr.rel (%p103) target = $region24
      $region23: #{my_solute_gcn_forward.4} parent=19 // pred_region
        %s106 = smul.u32 2, %s8
        %p107 = scmp.lt.s32.totalorder %s106, 3
        %s108 = scalar_select %p107, %s106, 3
        %s109 = smul.addr %s108, 4
        %s110 = scalar_lea.vmem %s0, %s109
        %s111 = smul.u32 2, %s8
      $region24: #{my_solute_gcn_forward.4} parent=19 // pred_fallthru
        _
    $region20: #{my_solute_gcn_forward.4} parent=5 // pred_fallthru
      _
    %p112 = scmp.le.s32.totalorder 1, %s8
    %p113 = scmp.lt.s32.totalorder %s8, 3
    %p114 = pnand %p112, %p113
    %p115 = pneg %p114
    // Predicated region
    $region25: #{my_solute_gcn_forward.4} parent=5 // pred_check
      _
    $region26: #{my_solute_gcn_forward.4} parent=5 // pred_check_branch
      %117 = sbr.rel (%p114) target = $region28
    $region27: #{my_solute_gcn_forward.4} parent=5 // pred_region
      %s118 = ssub.s32 %s8, 1
      %s119 = smul.u32 2, %s13
      %p120 = scmp.lt.s32.totalorder %s119, 3
      %s121 = scalar_select %p120, %s119, 3
      %s122 = smul.addr %s121, 4
      %s123 = scalar_lea.vmem %s0, %s122
      %p124 = pneg %p34
      %p125 = pneg %p31
      %p126 = pneg %p55
      %p127 = pneg %p52
      %p128 = pneg %p81
      %p129 = pneg %p78
      %s130 = smul.u32 2, %s13
      %p131 = scmp.lt.s32.totalorder %s130, 3
      %s132 = scalar_select %p131, %s130, 3
      %s133 = smul.addr %s132, 4
      %s134 = scalar_lea.vmem %s2, %s133
      %s135 = smul.u32 2, %s13
      %p136 = scmp.lt.s32.totalorder %s135, 3
      %s137 = scalar_select %p136, %s135, 3
      %s138 = smul.addr %s137, 4
      %s139 = scalar_lea.vmem %s0, %s138
      %s140 = smul.u32 2, %s13
      %s141 = smul.u32 2, %s13
      %p142 = scmp.lt.s32.totalorder %s141, 3
      %s143 = scalar_select %p142, %s141, 3
      %s144 = smul.addr %s143, 4
      %s145 = scalar_lea.vmem %s2, %s144
      %s146 = smul.u32 2, %s13
      %v148 = vld [vmem:[%s139] sm:$0xf]
      %v149 = vld [vmem:[%s139 + $0x4] sm:$0xf]
      %v150 = vld [vmem:[%s1] sm:$0xf]
      %v151 = vld [vmem:[%s1 + $0x4] sm:$0xf]
      %v152 = vld [vmem:[%s1 + $0x8] sm:$0xf]
      %v153 = vld [vmem:[%s1 + $0xc] sm:$0xf]
      %v154 = vld [vmem:[%s1 + $0x10] sm:$0xf]
      %v155 = vld [vmem:[%s1 + $0x14] sm:$0xf]
      %v156 = vld [vmem:[%s1 + $0x18] sm:$0xf]
      %v157 = vld [vmem:[%s1 + $0x1c] sm:$0xf]
      %v158 = vld [vmem:[%s1 + $0x20] sm:$0xf]
      %v159 = vld [vmem:[%s1 + $0x24] sm:$0xf]
      %v160 = vld [vmem:[%s1 + $0x28] sm:$0xf]
      %v161 = vld [vmem:[%s1 + $0x2c] sm:$0xf]
      %v162 = vld [vmem:[%s1 + $0x30] sm:$0xf]
      %v163 = vld [vmem:[%s1 + $0x34] sm:$0xf]
      %v164 = vld [vmem:[%s1 + $0x38] sm:$0xf]
      %v165 = vld [vmem:[%s1 + $0x3c] sm:$0xf]
      %v168 = vunpack.c.l.b16 %v148
      %v169 = vunpack.c.l.b16 %v149
      %v170 = vpack.c.b16 %v169, %v168
      %v188 = vunpack.c.l.b16 %v150
      %v189 = vunpack.c.l.b16 %v151
      %v190 = vunpack.c.l.b16 %v152
      %v191 = vunpack.c.l.b16 %v153
      %v192 = vunpack.c.l.b16 %v154
      %v193 = vunpack.c.l.b16 %v155
      %v194 = vunpack.c.l.b16 %v156
      %v195 = vunpack.c.l.b16 %v157
      %v196 = vunpack.c.l.b16 %v158
      %v197 = vunpack.c.l.b16 %v159
      %v198 = vunpack.c.l.b16 %v160
      %v199 = vunpack.c.l.b16 %v161
      %v200 = vunpack.c.l.b16 %v162
      %v201 = vunpack.c.l.b16 %v163
      %v202 = vunpack.c.l.b16 %v164
      %v203 = vunpack.c.l.b16 %v165
      %v204 = vpack.c.b16 %v189, %v188
      %v205 = vpack.c.b16 %v191, %v190
      %v206 = vpack.c.b16 %v193, %v192
      %v207 = vpack.c.b16 %v195, %v194
      %v208 = vpack.c.b16 %v197, %v196
      %v209 = vpack.c.b16 %v199, %v198
      %v210 = vpack.c.b16 %v201, %v200
      %v211 = vpack.c.b16 %v203, %v202
      %220 = vmatprep.subr.bf16.mxu0 0
      %221 = vmatpush1.bf16.msra.mxu0 %v211
      %222 = vmatprep.subr.bf16.mxu0 0
      %223 = vmatpush1.bf16.msra.mxu0 %v210
      %224 = vmatprep.subr.bf16.mxu0 0
      %225 = vmatpush1.bf16.msra.mxu0 %v209
      %226 = vmatprep.subr.bf16.mxu0 0
      %227 = vmatpush1.bf16.msra.mxu0 %v208
      %228 = vmatprep.subr.bf16.mxu0 0
      %229 = vmatpush1.bf16.msra.mxu0 %v207
      %230 = vmatprep.subr.bf16.mxu0 0
      %231 = vmatpush1.bf16.msra.mxu0 %v206
      %232 = vmatprep.subr.bf16.mxu0 0
      %233 = vmatpush1.bf16.msra.mxu0 %v205
      %234 = vmatprep.subr.bf16.mxu0 0
      %235 = vmatpush1.bf16.msra.mxu0 %v204
      %236 = vmatprep.subr.bf16.mxu0 0
      %237 = vmatpush2.bf16.msra.mxu0 0
      %238 = vmatprep.subr.bf16.mxu0 0
      %239 = vmatpush2.bf16.msra.mxu0 0
      %240 = vmatprep.subr.bf16.mxu0 0
      %241 = vmatpush2.bf16.msra.mxu0 0
      %242 = vmatprep.subr.bf16.mxu0 0
      %243 = vmatpush2.bf16.msra.mxu0 0
      %244 = vmatprep.subr.bf16.mxu0 0
      %245 = vmatpush2.bf16.msra.mxu0 0
      %246 = vmatprep.subr.bf16.mxu0 0
      %247 = vmatpush2.bf16.msra.mxu0 0
      %248 = vmatprep.subr.bf16.mxu0 0
      %249 = vmatpush2.bf16.msra.mxu0 0
      %250 = vmatprep.subr.bf16.mxu0 0
      %251 = vmatpush2.bf16.msra.mxu0 0
      %252 = vmatprep.mubr.bf16.mxu0 0
      %253 = vmatmul.mubr.bf16.gmra.mxu0 %v170
      %v254 = vpop.f32.mrf.mxu0
      %v255 = vadd.f32 0.0, %v254
      %v256 = vpop.f32.mrf.mxu0
      %v257 = vpop.f32.mrf.mxu0
      %v258 = vadd.f32 0.0, %v257
      %v259 = vpop.f32.mrf.mxu0
      %260 = vdwg.mxu0
      %v261 = vpack.c.bf16 %v258, %v255
      %v263 = vunpack.c.l.b16 %v261
      %v264 = vunpack.c.h.b16 %v261
      %v265 = vpack.c.b16 %v263, %v263
      %v266 = vpack.c.b16 %v264, %v264
      %269 = vst [vmem:[%s145] sm:$0xf] %v265
      %270 = vst [vmem:[%s145 + $0x4] sm:$0xf] %v266
      %s271 = smul.u32 2, %s13
      %p272 = scmp.lt.s32.totalorder %s271, 3
      %s273 = scalar_select %p272, %s271, 3
      %s274 = smul.addr %s273, 4
      %s275 = scalar_lea.vmem %s2, %s274
      // Predicated region
      $region29: #{my_solute_gcn_forward.4} parent=27 // pred_check
        %p276 = pneg %p78
      $region30: #{my_solute_gcn_forward.4} parent=27 // pred_check_branch
        %278 = sbr.rel (%p276) target = $region32
      $region31: #{my_solute_gcn_forward.4} parent=27 // pred_region
        %s279 = smul.u32 2, %s13
      $region32: #{my_solute_gcn_forward.4} parent=27 // pred_fallthru
        _
    $region28: #{my_solute_gcn_forward.4} parent=5 // pred_fallthru
      _
    %p280 = scmp.le.s32.totalorder 2, %s8
    // Predicated region
    $region33: #{my_solute_gcn_forward.4} parent=5 // pred_check
      %p281 = pneg %p280
    $region34: #{my_solute_gcn_forward.4} parent=5 // pred_check_branch
      %283 = sbr.rel (%p281) target = $region36
    $region35: #{my_solute_gcn_forward.4} parent=5 // pred_region
      %s284 = ssub.s32 %s8, 2
      // Predicated region
      $region37: #{my_solute_gcn_forward.4} parent=35 // pred_check
        %p285 = pneg %p84
      $region38: #{my_solute_gcn_forward.4} parent=35 // pred_check_branch
        %287 = sbr.rel (%p285) target = $region40
      $region39: #{my_solute_gcn_forward.4} parent=35 // pred_region
        %s288 = smul.u32 2, %s14
        %p289 = scmp.lt.s32.totalorder %s288, 3
        %s290 = scalar_select %p289, %s288, 3
        %s291 = smul.addr %s290, 4
        %s292 = scalar_lea.vmem %s2, %s291
      $region40: #{my_solute_gcn_forward.4} parent=35 // pred_fallthru
        _
    $region36: #{my_solute_gcn_forward.4} parent=5 // pred_fallthru
      _
  $region6: #{my_solute_gcn_forward.4} parent=0 // loop_footer
    %s12 = sadd.s32 1, %s8
  $region7: #{my_solute_gcn_forward.4} parent=0 // loop_footer_branch
    %7 = sbr.rel target = $region3
  $region8: #{my_solute_gcn_forward.4} parent=0 // loop_exit
    _

</llo_original>
